<compile_context>
chip_gen: v6e
topology: v6e:2x2x1
jax: 0.10.0
libtpu: 0.0.40
codegen_flags: <defaults>
</compile_context>

<pallas_src>
import jax
import jax.numpy as jnp
from jax.experimental import pallas as pl
from jax.experimental.pallas import tpu as pltpu


def _round_up(n, m):
    return (n + m - 1) // m * m


def _io_dtype(dt):
    """Dtypes we stream through HBM unchanged; everything else goes via f32."""
    dt = jnp.dtype(dt)
    if dt == jnp.dtype(jnp.bfloat16) or dt == jnp.dtype(jnp.float32):
        return dt
    return jnp.dtype(jnp.float32)


# ---------------------------------------------------------------------------
# Pallas kernel: elementwise bi-hyperbolic activation (compute in f32)
# ---------------------------------------------------------------------------
def _bi_hyperbolic_kernel(x_ref, lam_ref, t1_ref, t2_ref, o_ref):
    x = x_ref[...].astype(jnp.float32)
    lam = lam_ref[...].astype(jnp.float32)
    t1 = t1_ref[...].astype(jnp.float32)
    t2 = t2_ref[...].astype(jnp.float32)
    # 1/16 * (4*lam*x +/- 1)^2 == (0.25 * (4*lam*x +/- 1))^2
    g = 4.0 * lam * x
    a = 0.25 * (g + 1.0)
    b = 0.25 * (g - 1.0)
    out = jnp.sqrt(a * a + t1 * t1) - jnp.sqrt(b * b + t2 * t2)
    o_ref[...] = out.astype(o_ref.dtype)


# ---------------------------------------------------------------------------
# Wrapper: lane-dense (rows, lane) slab, large row tiles, partial final block
# ---------------------------------------------------------------------------
def bi_hyperbolic(x, lam, tau_1, tau_2, *, lane=None, max_block_elems=512 * 1024):
    """Elementwise bi-hyperbolic activation. All args share x.shape."""
    orig_shape = x.shape
    n = x.size
    out_dtype = _io_dtype(x.dtype)

    operands = [x, lam, tau_1, tau_2]
    io_dtypes = [_io_dtype(a.dtype) for a in operands]

    # Lane width: prefer a 128-multiple that divides n exactly -> reshape is a
    # free view and no HBM pad copy is needed.  Otherwise fall back to 512 and
    # pad the (single) tail only.
    if lane is None:
        lane = 512
        for cand in (1024, 512, 256, 128):
            if n % cand == 0:
                lane = cand
                break

    rows = pl.cdiv(n, lane)
    pad = rows * lane - n

    # Row-tile size: ~512K elements per stream per buffer (2 MiB f32 / 1 MiB
    # bf16).  When the whole slab fits in one tile, use a full-extent block
    # (legal for any row count); otherwise keep tm a multiple of 16 so both
    # f32 (8,128) and bf16 (16,128) tiling constraints are satisfied, and let
    # Pallas mask the partial final block (no rounding of `rows` up to tm).
    tm_cap = max(16, (max_block_elems // lane) // 16 * 16)
    tm = rows if rows <= tm_cap else tm_cap
    num_blocks = pl.cdiv(rows, tm)

    def prep(a, io_dt):
        a = a.reshape(-1)
        if a.dtype != io_dt:
            a = a.astype(io_dt)
        if pad:
            a = jnp.pad(a, (0, pad))
        return a.reshape(rows, lane)

    prepped = [prep(a, dt) for a, dt in zip(operands, io_dtypes)]

    # Right-sized VMEM budget: double-buffered tiles for 4 inputs + 1 output,
    # plus headroom for Mosaic internal scratch.  Never ask for 64 MiB (that
    # is the entire physical VMEM on v7x).
    tile_elems = tm * lane
    tile_bytes = sum(2 * tile_elems * jnp.dtype(dt).itemsize for dt in io_dtypes)
    tile_bytes += 2 * tile_elems * jnp.dtype(out_dtype).itemsize
    vmem_limit = min(max(tile_bytes + (4 << 20), 16 << 20), 40 << 20)

    bytes_per_elem = sum(jnp.dtype(dt).itemsize for dt in io_dtypes)
    bytes_per_elem += jnp.dtype(out_dtype).itemsize
    cost = pl.CostEstimate(
        flops=12 * n,
        transcendentals=2 * n,           # two sqrts per element (EUP)
        bytes_accessed=n * bytes_per_elem,
    )

    out = pl.pallas_call(
        _bi_hyperbolic_kernel,
        out_shape=jax.ShapeDtypeStruct((rows, lane), out_dtype),
        grid=(num_blocks,),
        in_specs=[pl.BlockSpec((tm, lane), lambda i: (i, 0)) for _ in range(4)],
        out_specs=pl.BlockSpec((tm, lane), lambda i: (i, 0)),
        compiler_params=pltpu.CompilerParams(
            dimension_semantics=("parallel",),   # v7x: shard rows over 2 TCs
            vmem_limit_bytes=int(vmem_limit),
        ),
        cost_estimate=cost,
    )(*prepped)

    if pad:
        out = out.reshape(-1)[:n]
    return out.reshape(orig_shape)


# ---------------------------------------------------------------------------
# Module-equivalent: lazy per-element parameters + forward
# ---------------------------------------------------------------------------
def init_adaptative_params(key, input_shape, in_size, out_size, gain=1.0,
                           dtype=jnp.float32):
    """Mirrors the module's lazy parameter creation (done host-side, not in the
    kernel): lambda = ones(size), tau_i ~ N(0, gain*sqrt(2/(fan_in+fan_out)))."""
    # TODO(synk): PyTorch creates these lazily on first forward; here they are
    # created eagerly once the input shape is known.
    k1, k2 = jax.random.split(key)
    std = gain * (2.0 / (in_size + out_size)) ** 0.5
    return {
        "lambda": jnp.ones(input_shape, dtype),
        "tau_1": (std * jax.random.normal(k1, input_shape, jnp.float32)).astype(dtype),
        "tau_2": (std * jax.random.normal(k2, input_shape, jnp.float32)).astype(dtype),
    }


def adaptative_activation_forward(params, x):
    return bi_hyperbolic(x, params["lambda"], params["tau_1"], params["tau_2"])


def _reference(params, x):
    lam = params["lambda"].astype(jnp.float32)
    t1 = params["tau_1"].astype(jnp.float32)
    t2 = params["tau_2"].astype(jnp.float32)
    xf = x.astype(jnp.float32)
    return (jnp.sqrt(1.0 / 16.0 * (4.0 * lam * xf + 1.0) ** 2 + t1 ** 2)
            - jnp.sqrt(1.0 / 16.0 * (4.0 * lam * xf - 1.0) ** 2 + t2 ** 2))


if __name__ == "__main__":
    key = jax.random.PRNGKey(0)
    pkey, xkey = jax.random.split(key)

    # Small deterministic example: (B, C, H, W) = (2, 4, 16, 16)
    x = jax.random.normal(xkey, (2, 4, 16, 16), jnp.float32)
    in_size = out_size = 4 * 16 * 16
    params = init_adaptative_params(pkey, x.shape, in_size, out_size)

    fwd = jax.jit(adaptative_activation_forward)
    y = fwd(params, x)
    jax.block_until_ready(y)

    assert y.shape == x.shape and y.dtype == x.dtype
    y_ref = _reference(params, x)
    assert jnp.allclose(y, y_ref.astype(y.dtype), atol=1e-5, rtol=1e-5)

    # Also exercise a non-128-aligned shape (partial final block + tail pad)
    # and a bf16 path (narrow HBM I/O, f32 compute, bf16 output).
    x2 = jax.random.normal(jax.random.PRNGKey(1), (3, 5, 7), jnp.bfloat16)
    params2 = init_adaptative_params(jax.random.PRNGKey(2), x2.shape, 35, 35,
                                     dtype=jnp.bfloat16)
    y2 = jax.jit(adaptative_activation_forward)(params2, x2)
    jax.block_until_ready(y2)
    assert y2.shape == x2.shape and y2.dtype == x2.dtype
    assert jnp.allclose(y2.astype(jnp.float32), _reference(params2, x2),
                        atol=2e-2, rtol=2e-2)

    print("KERNEL_OK")
</pallas_src>

<mosaic_0001>
module attributes {stable_mosaic.version = 11 : i64} {
  func.func @_bi_hyperbolic_kernel(%arg0: i32, %arg1: memref<2x1024xf32, #tpu.memory_space<vmem>>, %arg2: memref<2x1024xf32, #tpu.memory_space<vmem>>, %arg3: memref<2x1024xf32, #tpu.memory_space<vmem>>, %arg4: memref<2x1024xf32, #tpu.memory_space<vmem>>, %arg5: memref<2x1024xf32, #tpu.memory_space<vmem>>) attributes {dimension_semantics = [#tpu.dimension_semantics<parallel>], iteration_bounds = array<i64: 1>, scalar_prefetch = 0 : i64, scratch_operands = 0 : i64, tpu.core_type = #tpu.core_type<tc>, window_params = [{transform_indices = @transform_0, window_bounds = array<i64: 2, 1024>}, {transform_indices = @transform_1, window_bounds = array<i64: 2, 1024>}, {transform_indices = @transform_2, window_bounds = array<i64: 2, 1024>}, {transform_indices = @transform_3, window_bounds = array<i64: 2, 1024>}, {transform_indices = @transform_4, window_bounds = array<i64: 2, 1024>}]} {
    %c0 = arith.constant 0 : index
    %c0_0 = arith.constant 0 : index
    %0 = vector.load %arg1[%c0, %c0_0] : memref<2x1024xf32, #tpu.memory_space<vmem>>, vector<2x1024xf32>
    %c0_1 = arith.constant 0 : index
    %c0_2 = arith.constant 0 : index
    %1 = vector.load %arg2[%c0_1, %c0_2] : memref<2x1024xf32, #tpu.memory_space<vmem>>, vector<2x1024xf32>
    %c0_3 = arith.constant 0 : index
    %c0_4 = arith.constant 0 : index
    %2 = vector.load %arg3[%c0_3, %c0_4] : memref<2x1024xf32, #tpu.memory_space<vmem>>, vector<2x1024xf32>
    %c0_5 = arith.constant 0 : index
    %c0_6 = arith.constant 0 : index
    %3 = vector.load %arg4[%c0_5, %c0_6] : memref<2x1024xf32, #tpu.memory_space<vmem>>, vector<2x1024xf32>
    %cst = arith.constant 4.000000e+00 : f32
    %4 = vector.broadcast %cst : f32 to vector<2x1024xf32>
    %5 = arith.mulf %4, %1 : vector<2x1024xf32>
    %6 = arith.mulf %5, %0 : vector<2x1024xf32>
    %cst_7 = arith.constant 1.000000e+00 : f32
    %7 = vector.broadcast %cst_7 : f32 to vector<2x1024xf32>
    %8 = arith.addf %6, %7 : vector<2x1024xf32>
    %cst_8 = arith.constant 2.500000e-01 : f32
    %9 = vector.broadcast %cst_8 : f32 to vector<2x1024xf32>
    %10 = arith.mulf %9, %8 : vector<2x1024xf32>
    %cst_9 = arith.constant 1.000000e+00 : f32
    %11 = vector.broadcast %cst_9 : f32 to vector<2x1024xf32>
    %12 = arith.subf %6, %11 : vector<2x1024xf32>
    %cst_10 = arith.constant 2.500000e-01 : f32
    %13 = vector.broadcast %cst_10 : f32 to vector<2x1024xf32>
    %14 = arith.mulf %13, %12 : vector<2x1024xf32>
    %15 = arith.mulf %10, %10 : vector<2x1024xf32>
    %16 = arith.mulf %2, %2 : vector<2x1024xf32>
    %17 = arith.addf %15, %16 : vector<2x1024xf32>
    %18 = math.sqrt %17 : vector<2x1024xf32>
    %19 = arith.mulf %14, %14 : vector<2x1024xf32>
    %20 = arith.mulf %3, %3 : vector<2x1024xf32>
    %21 = arith.addf %19, %20 : vector<2x1024xf32>
    %22 = math.sqrt %21 : vector<2x1024xf32>
    %23 = arith.subf %18, %22 : vector<2x1024xf32>
    %c0_11 = arith.constant 0 : index
    %c0_12 = arith.constant 0 : index
    %24 = vector.load %arg5[%c0_11, %c0_12] : memref<2x1024xf32, #tpu.memory_space<vmem>>, vector<2x1024xf32>
    tpu.vector_store %arg5[%c0_11, %c0_12], %23 {strides = array<i32>} : memref<2x1024xf32, #tpu.memory_space<vmem>>, vector<2x1024xf32>,
    return
  }
  func.func @transform_0(%arg0: i32) -> (i32, i32) {
    %c0_i32 = arith.constant 0 : i32
    %c0_i32_0 = arith.constant 0 : i32
    return %arg0, %c0_i32 : i32, i32
  }
  func.func @transform_1(%arg0: i32) -> (i32, i32) {
    %c0_i32 = arith.constant 0 : i32
    %c0_i32_0 = arith.constant 0 : i32
    return %arg0, %c0_i32 : i32, i32
  }
  func.func @transform_2(%arg0: i32) -> (i32, i32) {
    %c0_i32 = arith.constant 0 : i32
    %c0_i32_0 = arith.constant 0 : i32
    return %arg0, %c0_i32 : i32, i32
  }
  func.func @transform_3(%arg0: i32) -> (i32, i32) {
    %c0_i32 = arith.constant 0 : i32
    %c0_i32_0 = arith.constant 0 : i32
    return %arg0, %c0_i32 : i32, i32
  }
  func.func @transform_4(%arg0: i32) -> (i32, i32) {
    %c0_i32 = arith.constant 0 : i32
    %c0_i32_0 = arith.constant 0 : i32
    return %arg0, %c0_i32 : i32, i32
  }
}

</mosaic_0001>

<llo_original>
// kernel: adaptative_activation_forward.1
$region0: #{adaptative_activation_forward.1}
  #allocation0 [shape = 'u32[]', space=smem, size = 0x4, offset = 0x4, fixed_abs, tag = 'smem constant byte address 0x4 - core index']
  #allocation1 [shape = 'u32[144,128]{1,0:T(1,128)}', space=vmem, size = 0x12000, scoped, tag = 'internal scratch']
  %s0 = inlined_call_operand.vmem [shape: f32[2,1024], index: 0, kind: input, shape index: {}]
  %s1 = inlined_call_operand.vmem [shape: f32[2,1024], index: 1, kind: input, shape index: {}]
  %s2 = inlined_call_operand.vmem [shape: f32[2,1024], index: 2, kind: input, shape index: {}]
  %s3 = inlined_call_operand.vmem [shape: f32[2,1024], index: 3, kind: input, shape index: {}]
  %s4 = inlined_call_operand.vmem [shape: f32[2,1024], index: 4, kind: output, shape index: {}]
  %s5 = sld [smem:[#allocation0]]
  $region26: #{adaptative_activation_forward.1} parent=0
    _
  %s7 = ssub.s32 1, %s5
  %s8 = scalar_select 0, %s7, %s5
  // Predicated region
  $region2: #{adaptative_activation_forward.1} parent=0 // pred_check
    _
  $region3: #{adaptative_activation_forward.1} parent=0 // pred_check_branch
    %10 = sbr.rel (0) target = $region5
  $region4: #{adaptative_activation_forward.1} parent=0 // pred_region
    _
  $region5: #{adaptative_activation_forward.1} parent=0 // pred_fallthru
    _
  // Predicated region
  $region6: #{adaptative_activation_forward.1} parent=0 // pred_check
    _
  $region7: #{adaptative_activation_forward.1} parent=0 // pred_check_branch
    %12 = sbr.rel (0) target = $region9
  $region8: #{adaptative_activation_forward.1} parent=0 // pred_region
    _
  $region9: #{adaptative_activation_forward.1} parent=0 // pred_fallthru
    _
  // Predicated region
  $region10: #{adaptative_activation_forward.1} parent=0 // pred_check
    _
  $region11: #{adaptative_activation_forward.1} parent=0 // pred_check_branch
    %14 = sbr.rel (0) target = $region13
  $region12: #{adaptative_activation_forward.1} parent=0 // pred_region
    _
  $region13: #{adaptative_activation_forward.1} parent=0 // pred_fallthru
    _
  // Predicated region
  $region14: #{adaptative_activation_forward.1} parent=0 // pred_check
    _
  $region15: #{adaptative_activation_forward.1} parent=0 // pred_check_branch
    %16 = sbr.rel (0) target = $region17
  $region16: #{adaptative_activation_forward.1} parent=0 // pred_region
    _
  $region17: #{adaptative_activation_forward.1} parent=0 // pred_fallthru
    _
  %v17 = vld [vmem:[%s0] sm:$0xff]
  %v18 = vld [vmem:[%s0 + $0x8] sm:$0xff]
  %v19 = vld [vmem:[%s1] sm:$0xff]
  %v20 = vld [vmem:[%s1 + $0x8] sm:$0xff]
  %v21 = vld [vmem:[%s2] sm:$0xff]
  %v22 = vld [vmem:[%s2 + $0x8] sm:$0xff]
  %v23 = vld [vmem:[%s3] sm:$0xff]
  %v24 = vld [vmem:[%s3 + $0x8] sm:$0xff]
  %v25 = vmul.f32 %v19, 4.0
  %v26 = vmul.f32 %v20, 4.0
  %v27 = vmul.f32 %v25, %v17
  %v28 = vmul.f32 %v26, %v18
  %v29 = vadd.f32 %v27, 1.0
  %v30 = vadd.f32 %v28, 1.0
  %v31 = vmul.f32 %v29, 0.25
  %v32 = vmul.f32 %v30, 0.25
  %v33 = vsub.f32 %v27, 1.0
  %v34 = vsub.f32 %v28, 1.0
  %v35 = vmul.f32 %v33, 0.25
  %v36 = vmul.f32 %v34, 0.25
  %v37 = vmul.f32 %v31, %v31
  %v38 = vmul.f32 %v32, %v32
  %v39 = vmul.f32 %v21, %v21
  %v40 = vmul.f32 %v22, %v22
  %v41 = vadd.f32 %v37, %v39
  %v42 = vadd.f32 %v38, %v40
  %v43 = vrsqrt.pop %v41
  %v44 = vmul.f32 %v41, %v43
  %vm45 = vcmp.eq.f32.partialorder %v41, inf
  %v46 = vsel %vm45, %v41, %v44
  %vm47 = vcmp.eq.f32.partialorder %v41, 0.0
  %v48 = vand.u32 %v41, 2147483648
  %v49 = vsel %vm47, %v48, %v46
  %v50 = vrsqrt.pop %v42
  %v51 = vmul.f32 %v42, %v50
  %vm52 = vcmp.eq.f32.partialorder %v42, inf
  %v53 = vsel %vm52, %v42, %v51
  %vm54 = vcmp.eq.f32.partialorder %v42, 0.0
  %v55 = vand.u32 %v42, 2147483648
  %v56 = vsel %vm54, %v55, %v53
  %v57 = vmul.f32 %v35, %v35
  %v58 = vmul.f32 %v36, %v36
  %v59 = vmul.f32 %v23, %v23
  %v60 = vmul.f32 %v24, %v24
  %v61 = vadd.f32 %v57, %v59
  %v62 = vadd.f32 %v58, %v60
  %v63 = vrsqrt.pop %v61
  %v64 = vmul.f32 %v61, %v63
  %vm65 = vcmp.eq.f32.partialorder %v61, inf
  %v66 = vsel %vm65, %v61, %v64
  %vm67 = vcmp.eq.f32.partialorder %v61, 0.0
  %v68 = vand.u32 %v61, 2147483648
  %v69 = vsel %vm67, %v68, %v66
  %v70 = vrsqrt.pop %v62
  %v71 = vmul.f32 %v62, %v70
  %vm72 = vcmp.eq.f32.partialorder %v62, inf
  %v73 = vsel %vm72, %v62, %v71
  %vm74 = vcmp.eq.f32.partialorder %v62, 0.0
  %v75 = vand.u32 %v62, 2147483648
  %v76 = vsel %vm74, %v75, %v73
  %v77 = vsub.f32 %v49, %v69
  %v78 = vsub.f32 %v56, %v76
  %79 = vst [vmem:[%s4] sm:$0xff] %v77
  %80 = vst [vmem:[%s4 + $0x8] sm:$0xff] %v78
  // Predicated region
  $region18: #{adaptative_activation_forward.1} parent=0 // pred_check
    _
  $region19: #{adaptative_activation_forward.1} parent=0 // pred_check_branch
    %82 = sbr.rel (0) target = $region21
  $region20: #{adaptative_activation_forward.1} parent=0 // pred_region
    _
  $region21: #{adaptative_activation_forward.1} parent=0 // pred_fallthru
    _
  // Predicated region
  $region22: #{adaptative_activation_forward.1} parent=0 // pred_check
    _
  $region23: #{adaptative_activation_forward.1} parent=0 // pred_check_branch
    %84 = sbr.rel (0) target = $region25
  $region24: #{adaptative_activation_forward.1} parent=0 // pred_region
    _
  $region25: #{adaptative_activation_forward.1} parent=0 // pred_fallthru
    _

</llo_original>
